<compile_context>
chip_gen: v6e
topology: v6e:2x2x1
jax: 0.10.0
libtpu: 0.0.40
codegen_flags: <defaults>
</compile_context>

<pallas_src>
import functools

import jax
import jax.numpy as jnp
from jax.experimental import pallas as pl
from jax.experimental.pallas import tpu as pltpu


HIDDEN = 64          # per-head hidden width (fixed by the PyTorch module)
FUSED = 2 * HIDDEN   # 128: actor||critic fused lane width
BIAS_ROWS = 8        # bias rows padded to a full sublane group


def _round_up(n, m):
    return (n + m - 1) // m * m


# ----------------------------------------------------------------------------
# Pallas kernel: fused actor+critic forward (3 matmuls + tanh + masked softmax)
# ----------------------------------------------------------------------------
def _fused_kernel(x_ref, p_ref, out_ref, *, state_space, s_pad, action_space,
                  compute_dtype):
    S = state_space
    A = action_space
    r2 = s_pad                   # W2 row offset
    r3 = s_pad + FUSED           # W3 row offset
    rb = s_pad + 2 * FUSED       # bias rows offset

    x = x_ref[...].astype(compute_dtype)

    # Static slices out of the single packed parameter buffer.
    w1 = p_ref[0:S, :].astype(compute_dtype)            # (S, 128)
    w2 = p_ref[r2:r2 + FUSED, :].astype(compute_dtype)  # (128, 128) block-diag
    w3 = p_ref[r3:r3 + FUSED, :].astype(compute_dtype)  # (128, 128) padded
    b1 = p_ref[rb + 0:rb + 1, :]                         # (1, 128) f32
    b2 = p_ref[rb + 1:rb + 2, :]
    b3 = p_ref[rb + 2:rb + 3, :]

    h1 = jnp.tanh(jnp.dot(x, w1, preferred_element_type=jnp.float32) + b1)
    h2 = jnp.tanh(
        jnp.dot(h1.astype(compute_dtype), w2,
                preferred_element_type=jnp.float32) + b2)
    z = jnp.dot(h2.astype(compute_dtype), w3,
                preferred_element_type=jnp.float32) + b3   # (B, 128) f32

    # Masked softmax over the first A lanes; lane A carries the critic value.
    lane = jax.lax.broadcasted_iota(jnp.int32, z.shape, 1)
    is_actor = lane < A
    logits = jnp.where(is_actor, z, -jnp.inf)
    m = jnp.max(logits, axis=-1, keepdims=True)
    e = jnp.exp(logits - m)                                # padding lanes -> 0
    s = jnp.sum(e, axis=-1, keepdims=True)
    probs = e * pl.reciprocal(s, approx=False)

    # Lane-dense single output store: probs in lanes <A, value in lane A,
    # zeros (from the zero-padded W3/b3 columns) elsewhere.
    out_ref[...] = jnp.where(is_actor, probs, z)


# ----------------------------------------------------------------------------
# Parameter packing: 12 arrays -> one (S_pad + 264, 128) f32 buffer
# ----------------------------------------------------------------------------
def pack_params(params, state_space, action_space):
    S = state_space
    A = action_space
    assert A + 1 <= FUSED, "action_space + 1 must fit in 128 lanes"
    s_pad = _round_up(S, 8)
    R = s_pad + 2 * FUSED + BIAS_ROWS

    P = jnp.zeros((R, FUSED), dtype=jnp.float32)
    # Layer 1: [w1a | w1c]
    P = P.at[:S, :HIDDEN].set(params["w1a"])
    P = P.at[:S, HIDDEN:].set(params["w1c"])
    # Layer 2: block-diagonal
    r = s_pad
    P = P.at[r:r + HIDDEN, :HIDDEN].set(params["w2a"])
    P = P.at[r + HIDDEN:r + FUSED, HIDDEN:].set(params["w2c"])
    # Layer 3: actor -> cols 0:A (top 64 rows), critic -> col A (bottom 64 rows)
    r += FUSED
    P = P.at[r:r + HIDDEN, :A].set(params["w3a"])
    P = P.at[r + HIDDEN:r + FUSED, A:A + 1].set(params["w3c"])
    # Biases (kept f32 in the same buffer).
    r += FUSED
    P = P.at[r + 0, :HIDDEN].set(params["b1a"][0])
    P = P.at[r + 0, HIDDEN:].set(params["b1c"][0])
    P = P.at[r + 1, :HIDDEN].set(params["b2a"][0])
    P = P.at[r + 1, HIDDEN:].set(params["b2c"][0])
    P = P.at[r + 2, :A].set(params["b3a"][0])
    P = P.at[r + 2, A:A + 1].set(params["b3c"][0])
    return P


# ----------------------------------------------------------------------------
# Wrapper
# ----------------------------------------------------------------------------
def actor_critic_forward(x, packed, action_space, *,
                         compute_dtype=jnp.float32, tile_b=256):
    """x: (B, state_space) f32; packed: pack_params(...) buffer."""
    B, S = x.shape
    R = packed.shape[0]
    s_pad = R - (2 * FUSED + BIAS_ROWS)
    A = action_space

    kernel = functools.partial(
        _fused_kernel, state_space=S, s_pad=s_pad, action_space=A,
        compute_dtype=compute_dtype)

    B_pad = _round_up(B, 8)
    if B_pad <= tile_b:
        # Single invocation: no grid, no pipeline machinery, 2 in / 1 out DMA.
        x_pad = x if B_pad == B else jnp.pad(x, ((0, B_pad - B), (0, 0)))
        out = pl.pallas_call(
            kernel,
            out_shape=jax.ShapeDtypeStruct((B_pad, FUSED), jnp.float32),
        )(x_pad, packed)
    else:
        # Tile the batch; weights stay VMEM-resident (constant index_map);
        # batch axis is "parallel" so v7x shards it across its 2 TensorCores.
        B_pad = _round_up(B, tile_b)
        x_pad = x if B_pad == B else jnp.pad(x, ((0, B_pad - B), (0, 0)))
        n_tiles = B_pad // tile_b
        out = pl.pallas_call(
            kernel,
            grid=(n_tiles,),
            in_specs=[
                pl.BlockSpec((tile_b, S), lambda i: (i, 0)),
                pl.BlockSpec((R, FUSED), lambda i: (0, 0)),
            ],
            out_specs=pl.BlockSpec((tile_b, FUSED), lambda i: (i, 0)),
            out_shape=jax.ShapeDtypeStruct((B_pad, FUSED), jnp.float32),
            compiler_params=pltpu.CompilerParams(
                dimension_semantics=("parallel",)),
        )(x_pad, packed)

    probs = out[:B, :A]
    value = out[:B, A:A + 1]
    return probs, value


# ----------------------------------------------------------------------------
# Deterministic parameter init matching init_layer():
#   weight ~ N(0,1), per-output-row normalized to unit L2 norm, bias = 0.
# PyTorch Linear weight is (out, in); normalize there, transpose to (in, out).
# ----------------------------------------------------------------------------
def init_linear(key, in_features, out_features):
    w = jax.random.normal(key, (out_features, in_features), dtype=jnp.float32)
    w = w / jnp.sqrt(jnp.sum(w * w, axis=1, keepdims=True))
    b = jnp.zeros((1, out_features), dtype=jnp.float32)
    return w.T, b  # (in, out), (1, out)


def make_params(key, state_space, action_space, hidden=HIDDEN):
    keys = jax.random.split(key, 6)
    w1a, b1a = init_linear(keys[0], state_space, hidden)
    w2a, b2a = init_linear(keys[1], hidden, hidden)
    w3a, b3a = init_linear(keys[2], hidden, action_space)
    w1c, b1c = init_linear(keys[3], state_space, hidden)
    w2c, b2c = init_linear(keys[4], hidden, hidden)
    w3c, b3c = init_linear(keys[5], hidden, 1)
    return dict(
        w1a=w1a, b1a=b1a, w2a=w2a, b2a=b2a, w3a=w3a, b3a=b3a,
        w1c=w1c, b1c=b1c, w2c=w2c, b2c=b2c, w3c=w3c, b3c=b3c,
    )


# ----------------------------------------------------------------------------
# Pure-JAX reference
# ----------------------------------------------------------------------------
def reference_forward(x, p):
    h = jnp.tanh(x @ p["w1a"] + p["b1a"])
    h = jnp.tanh(h @ p["w2a"] + p["b2a"])
    logits = h @ p["w3a"] + p["b3a"]
    probs = jax.nn.softmax(logits, axis=-1)
    hc = jnp.tanh(x @ p["w1c"] + p["b1c"])
    hc = jnp.tanh(hc @ p["w2c"] + p["b2c"])
    value = hc @ p["w3c"] + p["b3c"]
    return probs, value


# TODO(synk): evaluate() (Categorical log_prob / entropy) is host-side policy
# bookkeeping on the returned probs, not part of the nn.Module forward kernel.

if __name__ == "__main__":
    key = jax.random.PRNGKey(0)
    k_x, k_p, k_big = jax.random.split(key, 3)

    state_space = 32
    action_space = 3
    batch = 8

    params = make_params(k_p, state_space, action_space)
    packed = pack_params(params, state_space, action_space)

    # --- small batch, f32, grid-less path ---
    x = jax.random.normal(k_x, (batch, state_space), dtype=jnp.float32)
    probs, value = actor_critic_forward(x, packed, action_space)
    probs = jax.block_until_ready(probs)
    value = jax.block_until_ready(value)
    probs_ref, value_ref = reference_forward(x, params)
    assert probs.shape == (batch, action_space)
    assert value.shape == (batch, 1)
    assert jnp.allclose(probs, probs_ref, atol=1e-5, rtol=1e-5)
    assert jnp.allclose(value, value_ref, atol=1e-5, rtol=1e-5)
    assert jnp.allclose(jnp.sum(probs, axis=-1), 1.0, atol=1e-5)

    # --- large batch, f32, tiled "parallel" grid path ---
    big_batch = 1024
    xb = jax.random.normal(k_big, (big_batch, state_space), dtype=jnp.float32)
    probs_b, value_b = actor_critic_forward(xb, packed, action_space,
                                            tile_b=256)
    probs_b = jax.block_until_ready(probs_b)
    value_b = jax.block_until_ready(value_b)
    probs_bref, value_bref = reference_forward(xb, params)
    assert probs_b.shape == (big_batch, action_space)
    assert value_b.shape == (big_batch, 1)
    assert jnp.allclose(probs_b, probs_bref, atol=1e-5, rtol=1e-5)
    assert jnp.allclose(value_b, value_bref, atol=1e-5, rtol=1e-5)

    # --- bf16 matmul path (v6e/v7x MXU); f32 bias/tanh/softmax, loose tol ---
    probs_h, value_h = actor_critic_forward(x, packed, action_space,
                                            compute_dtype=jnp.bfloat16)
    probs_h = jax.block_until_ready(probs_h)
    value_h = jax.block_until_ready(value_h)
    assert jnp.allclose(probs_h, probs_ref, atol=5e-2, rtol=5e-2)
    assert jnp.allclose(value_h, value_ref, atol=5e-2, rtol=5e-2)
    assert jnp.allclose(jnp.sum(probs_h, axis=-1), 1.0, atol=1e-3)

    print("KERNEL_OK")
</pallas_src>

<mosaic_0001>
module attributes {stable_mosaic.version = 11 : i64} {
  func.func @_fused_kernel(%arg0: memref<8x32xf32, #tpu.memory_space<vmem>>, %arg1: memref<296x128xf32, #tpu.memory_space<vmem>>, %arg2: memref<8x128xf32, #tpu.memory_space<vmem>>) attributes {dimension_semantics = [], scalar_prefetch = 0 : i64, scratch_operands = 0 : i64, tpu.core_type = #tpu.core_type<tc>} {
    %c0 = arith.constant 0 : index
    %c0_0 = arith.constant 0 : index
    %0 = vector.load %arg0[%c0, %c0_0] : memref<8x32xf32, #tpu.memory_space<vmem>>, vector<8x32xf32>
    %c0_1 = arith.constant 0 : index
    %c0_2 = arith.constant 0 : index
    %1 = vector.load %arg1[%c0_1, %c0_2] : memref<296x128xf32, #tpu.memory_space<vmem>>, vector<32x128xf32>
    %c32 = arith.constant 32 : index
    %c0_3 = arith.constant 0 : index
    %2 = vector.load %arg1[%c32, %c0_3] : memref<296x128xf32, #tpu.memory_space<vmem>>, vector<128x128xf32>
    %c160 = arith.constant 160 : index
    %c0_4 = arith.constant 0 : index
    %3 = vector.load %arg1[%c160, %c0_4] : memref<296x128xf32, #tpu.memory_space<vmem>>, vector<128x128xf32>
    %c288 = arith.constant 288 : index
    %c0_5 = arith.constant 0 : index
    %4 = vector.load %arg1[%c288, %c0_5] : memref<296x128xf32, #tpu.memory_space<vmem>>, vector<1x128xf32>
    %c289 = arith.constant 289 : index
    %c0_6 = arith.constant 0 : index
    %5 = vector.load %arg1[%c289, %c0_6] : memref<296x128xf32, #tpu.memory_space<vmem>>, vector<1x128xf32>
    %c290 = arith.constant 290 : index
    %c0_7 = arith.constant 0 : index
    %6 = vector.load %arg1[%c290, %c0_7] : memref<296x128xf32, #tpu.memory_space<vmem>>, vector<1x128xf32>
    %cst = arith.constant dense<0.000000e+00> : vector<8x128xf32>
    %7 = tpu.matmul %0, %1, %cst {dimension_numbers = #tpu.dot_dimension_numbers<[1], [0], [0], [1], [0, 0, 1, 1], [], []>} : vector<8x32xf32>, vector<32x128xf32>, vector<8x128xf32> -> vector<8x128xf32>
    %8 = vector.broadcast %4 : vector<1x128xf32> to vector<8x128xf32>
    %9 = arith.addf %7, %8 : vector<8x128xf32>
    %10 = math.tanh %9 : vector<8x128xf32>
    %cst_8 = arith.constant dense<0.000000e+00> : vector<8x128xf32>
    %11 = tpu.matmul %10, %2, %cst_8 {dimension_numbers = #tpu.dot_dimension_numbers<[1], [0], [0], [1], [0, 0, 1, 1], [], []>} : vector<8x128xf32>, vector<128x128xf32>, vector<8x128xf32> -> vector<8x128xf32>
    %12 = vector.broadcast %5 : vector<1x128xf32> to vector<8x128xf32>
    %13 = arith.addf %11, %12 : vector<8x128xf32>
    %14 = math.tanh %13 : vector<8x128xf32>
    %cst_9 = arith.constant dense<0.000000e+00> : vector<8x128xf32>
    %15 = tpu.matmul %14, %3, %cst_9 {dimension_numbers = #tpu.dot_dimension_numbers<[1], [0], [0], [1], [0, 0, 1, 1], [], []>} : vector<8x128xf32>, vector<128x128xf32>, vector<8x128xf32> -> vector<8x128xf32>
    %16 = vector.broadcast %6 : vector<1x128xf32> to vector<8x128xf32>
    %17 = arith.addf %15, %16 : vector<8x128xf32>
    %18 = tpu.iota {dimensions = array<i32: 1>} : vector<8x128xi32>
    %c3_i32 = arith.constant 3 : i32
    %19 = vector.broadcast %c3_i32 : i32 to vector<8x128xi32>
    %20 = arith.cmpi slt, %18, %19 : vector<8x128xi32>
    %cst_10 = arith.constant 0xFF800000 : f32
    %21 = vector.broadcast %cst_10 : f32 to vector<8x128xf32>
    %22 = arith.select %20, %17, %21 : vector<8x128xi1>, vector<8x128xf32>
    %cst_11 = arith.constant dense<0xFF800000> : vector<8xf32>
    %23 = vector.multi_reduction <maximumf>, %22, %cst_11 [1] : vector<8x128xf32> to vector<8xf32>
    %24 = vector.shape_cast %23 : vector<8xf32> to vector<8x1xf32>
    %25 = vector.broadcast %24 : vector<8x1xf32> to vector<8x128xf32>
    %26 = arith.subf %22, %25 : vector<8x128xf32>
    %27 = math.exp %26 : vector<8x128xf32>
    %cst_12 = arith.constant dense<0.000000e+00> : vector<8xf32>
    %28 = vector.multi_reduction <add>, %27, %cst_12 [1] : vector<8x128xf32> to vector<8xf32>
    %29 = vector.shape_cast %28 : vector<8xf32> to vector<8x1xf32>
    %30 = tpu.reciprocal %29 : vector<8x1xf32> -> vector<8x1xf32>
    %31 = vector.broadcast %30 : vector<8x1xf32> to vector<8x128xf32>
    %32 = arith.mulf %27, %31 : vector<8x128xf32>
    %33 = arith.select %20, %32, %17 : vector<8x128xi1>, vector<8x128xf32>
    %c0_13 = arith.constant 0 : index
    %c0_14 = arith.constant 0 : index
    %34 = vector.load %arg2[%c0_13, %c0_14] : memref<8x128xf32, #tpu.memory_space<vmem>>, vector<8x128xf32>
    tpu.vector_store %arg2[%c0_13, %c0_14], %33 {strides = array<i32>} : memref<8x128xf32, #tpu.memory_space<vmem>>, vector<8x128xf32>,
    return
  }
}

</mosaic_0001>

<llo_original>
// kernel: tpu_custom_call.1
$region0: #{tpu_custom_call.1}
  #allocation0 [shape = 'u32[]', space=smem, size = 0x4, offset = 0x4, fixed_abs, tag = 'smem constant byte address 0x4 - core index']
  #allocation1 [shape = 'u32[144,128]{1,0:T(1,128)}', space=vmem, size = 0x12000, scoped, tag = 'internal scratch']
  %s0 = inlined_call_operand.hbm [shape: f32[8,32], index: 0, kind: input, shape index: {}]
  %s1 = inlined_call_operand.hbm [shape: f32[296,128], index: 1, kind: input, shape index: {}]
  %s2 = inlined_call_operand.hbm [shape: f32[8,128], index: 2, kind: output, shape index: {}]
  %s3 = sld [smem:[#allocation0]]
  $region26: #{tpu_custom_call.1} parent=0
    _
  %s5 = ssub.s32 1, %s3
  %s6 = scalar_select 0, %s5, %s3
  $region1: #{tpu_custom_call.1} parent=0
    #allocation2 [shape = 'u8[4096]{0}', space=vmem, size = 0x1000, scoped, tag = 'input window, operand 0, single buffered']
    #allocation3 [shape = 's32[1]{0}', space=sflag, size = 0x4, scoped, tag = 'scoped memory for tpu_custom_call.1']
    #allocation4 [shape = 's32[1]{0}', space=sflag, size = 0x4, scoped, tag = 'scoped memory for tpu_custom_call.1']
    #allocation5 [shape = 'u8[151552]{0}', space=vmem, size = 0x25000, scoped, tag = 'input window, operand 1, single buffered']
    #allocation6 [shape = 's32[1]{0}', space=sflag, size = 0x4, scoped, tag = 'scoped memory for tpu_custom_call.1']
    #allocation7 [shape = 'u8[4096]{0}', space=vmem, size = 0x1000, scoped, tag = 'output window, operand 0, single buffered']
    %7 = vsyncpa [#allocation3], 0
    %8 = vsyncpa [#allocation6], 0
    %9 = vsyncpa [#allocation4], 0
    // Predicated region
    $region2: #{tpu_custom_call.1} parent=1 // pred_check
      _
    $region3: #{tpu_custom_call.1} parent=1 // pred_check_branch
      %11 = sbr.rel (0) target = $region5
    $region4: #{tpu_custom_call.1} parent=1 // pred_region
      %s13 = ssub.s32 128, 128
      %14 = vsyncadd [#allocation3], %s13
      %s16 = sshll.u32 [#allocation2], 4
      %s17 = int_to_ptr.vmem [resolvable:$true] %s16
      %19 = dma.hbm_to_vmem [thread:$0]  %s0, 128, %s17, [#allocation3]
    $region5: #{tpu_custom_call.1} parent=1 // pred_fallthru
      _
    // Predicated region
    $region6: #{tpu_custom_call.1} parent=1 // pred_check
      _
    $region7: #{tpu_custom_call.1} parent=1 // pred_check_branch
      %21 = sbr.rel (0) target = $region9
    $region8: #{tpu_custom_call.1} parent=1 // pred_region
      %s23 = ssub.s32 4736, 4736
      %24 = vsyncadd [#allocation6], %s23
      %s25 = sshll.u32 [#allocation5], 4
      %s26 = int_to_ptr.vmem [resolvable:$true] %s25
      %31 = dma.hbm_to_vmem [thread:$0]  %s1, 4736, %s26, [#allocation6], 128, 128, 8
    $region9: #{tpu_custom_call.1} parent=1 // pred_fallthru
      _
    // Predicated region
    $region10: #{tpu_custom_call.1} parent=1 // pred_check
      _
    $region11: #{tpu_custom_call.1} parent=1 // pred_check_branch
      %33 = sbr.rel (0) target = $region13
    $region12: #{tpu_custom_call.1} parent=1 // pred_region
      %34 = dma.done [#allocation3], 128
    $region13: #{tpu_custom_call.1} parent=1 // pred_fallthru
      _
    // Predicated region
    $region14: #{tpu_custom_call.1} parent=1 // pred_check
      _
    $region15: #{tpu_custom_call.1} parent=1 // pred_check_branch
      %36 = sbr.rel (0) target = $region17
    $region16: #{tpu_custom_call.1} parent=1 // pred_region
      %37 = dma.done [#allocation6], 4736
    $region17: #{tpu_custom_call.1} parent=1 // pred_fallthru
      _
    %v38 = vld [vmem:[#allocation2] sm:$0xff]
    %v39 = vld [vmem:[#allocation5] sm:$0xff]
    %v40 = vld [vmem:[#allocation5 + $0x8] sm:$0xff]
    %v41 = vld [vmem:[#allocation5 + $0x10] sm:$0xff]
    %v42 = vld [vmem:[#allocation5 + $0x18] sm:$0xff]
    %v43 = vld [vmem:[#allocation5 + $0x20] sm:$0xff]
    %v44 = vld [vmem:[#allocation5 + $0x28] sm:$0xff]
    %v45 = vld [vmem:[#allocation5 + $0x30] sm:$0xff]
    %v46 = vld [vmem:[#allocation5 + $0x38] sm:$0xff]
    %v47 = vld [vmem:[#allocation5 + $0x40] sm:$0xff]
    %v48 = vld [vmem:[#allocation5 + $0x48] sm:$0xff]
    %v49 = vld [vmem:[#allocation5 + $0x50] sm:$0xff]
    %v50 = vld [vmem:[#allocation5 + $0x58] sm:$0xff]
    %v51 = vld [vmem:[#allocation5 + $0x60] sm:$0xff]
    %v52 = vld [vmem:[#allocation5 + $0x68] sm:$0xff]
    %v53 = vld [vmem:[#allocation5 + $0x70] sm:$0xff]
    %v54 = vld [vmem:[#allocation5 + $0x78] sm:$0xff]
    %v55 = vld [vmem:[#allocation5 + $0x80] sm:$0xff]
    %v56 = vld [vmem:[#allocation5 + $0x88] sm:$0xff]
    %v57 = vld [vmem:[#allocation5 + $0x90] sm:$0xff]
    %v58 = vld [vmem:[#allocation5 + $0x98] sm:$0xff]
    %v59 = vld [vmem:[#allocation5 + $0xa0] sm:$0xff]
    %v60 = vld [vmem:[#allocation5 + $0xa8] sm:$0xff]
    %v61 = vld [vmem:[#allocation5 + $0xb0] sm:$0xff]
    %v62 = vld [vmem:[#allocation5 + $0xb8] sm:$0xff]
    %v63 = vld [vmem:[#allocation5 + $0xc0] sm:$0xff]
    %v64 = vld [vmem:[#allocation5 + $0xc8] sm:$0xff]
    %v65 = vld [vmem:[#allocation5 + $0xd0] sm:$0xff]
    %v66 = vld [vmem:[#allocation5 + $0xd8] sm:$0xff]
    %v67 = vld [vmem:[#allocation5 + $0xe0] sm:$0xff]
    %v68 = vld [vmem:[#allocation5 + $0xe8] sm:$0xff]
    %v69 = vld [vmem:[#allocation5 + $0xf0] sm:$0xff]
    %v70 = vld [vmem:[#allocation5 + $0xf8] sm:$0xff]
    %v71 = vld [vmem:[#allocation5 + $0x100] sm:$0xff]
    %v72 = vld [vmem:[#allocation5 + $0x108] sm:$0xff]
    %v73 = vld [vmem:[#allocation5 + $0x110] sm:$0xff]
    %v74 = vld [vmem:[#allocation5 + $0x118] sm:$0xff]
    %v75 = vld [vmem:[#allocation5 + $0x120] sm:$0x1]
    %v76 = vld [vmem:[#allocation5 + $0x121] sm:$0x1]
    %v77 = vld [vmem:[#allocation5 + $0x122] sm:$0x1]
    %v78 = vlaneseq
    %v79 = vshrl.u32 %v78, 7
    %v80 = vsub.s32 0, %v79
    %v81 = vrot.slane %v75, %v80
    %vm82 = vcmask 261120
    %v84 = vsel %vm82, %v38, 0
    %86 = vmatprep.subr.mxu0 0.0
    %87 = vmatpush1.msra.mxu0 0.0
    %88 = vmatprep.subr.mxu0 0.0
    %89 = vmatpush1.msra.mxu0 0.0
    %90 = vmatprep.subr.mxu0 0.0
    %91 = vmatpush1.msra.mxu0 0.0
    %92 = vmatprep.subr.mxu0 0.0
    %93 = vmatpush1.msra.mxu0 0.0
    %94 = vmatprep.subr.mxu0 0.0
    %95 = vmatpush1.msra.mxu0 0.0
    %96 = vmatprep.subr.mxu0 0.0
    %97 = vmatpush1.msra.mxu0 0.0
    %98 = vmatprep.subr.mxu0 0.0
    %99 = vmatpush1.msra.mxu0 0.0
    %100 = vmatprep.subr.mxu0 0.0
    %101 = vmatpush1.msra.mxu0 0.0
    %102 = vmatprep.subr.mxu0 0.0
    %103 = vmatpush1.msra.mxu0 0.0
    %104 = vmatprep.subr.mxu0 0.0
    %105 = vmatpush1.msra.mxu0 0.0
    %106 = vmatprep.subr.mxu0 0.0
    %107 = vmatpush1.msra.mxu0 0.0
    %108 = vmatprep.subr.mxu0 0.0
    %109 = vmatpush1.msra.mxu0 0.0
    %110 = vmatprep.subr.mxu0 0.0
    %111 = vmatpush1.msra.mxu0 %v42
    %112 = vmatprep.subr.mxu0 0.0
    %113 = vmatpush1.msra.mxu0 %v41
    %114 = vmatprep.subr.mxu0 0.0
    %115 = vmatpush1.msra.mxu0 %v40
    %116 = vmatprep.subr.mxu0 0.0
    %117 = vmatpush1.msra.mxu0 %v39
    %118 = vmatprep.subr.mxu0 0.0
    %119 = vmatpush2.msra.mxu0 0.0
    %120 = vmatprep.subr.mxu0 0.0
    %121 = vmatpush2.msra.mxu0 0.0
    %122 = vmatprep.subr.mxu0 0.0
    %123 = vmatpush2.msra.mxu0 0.0
    %124 = vmatprep.subr.mxu0 0.0
    %125 = vmatpush2.msra.mxu0 0.0
    %126 = vmatprep.subr.mxu0 0.0
    %127 = vmatpush2.msra.mxu0 0.0
    %128 = vmatprep.subr.mxu0 0.0
    %129 = vmatpush2.msra.mxu0 0.0
    %130 = vmatprep.subr.mxu0 0.0
    %131 = vmatpush2.msra.mxu0 0.0
    %132 = vmatprep.subr.mxu0 0.0
    %133 = vmatpush2.msra.mxu0 0.0
    %134 = vmatprep.subr.mxu0 0.0
    %135 = vmatpush2.msra.mxu0 0.0
    %136 = vmatprep.subr.mxu0 0.0
    %137 = vmatpush2.msra.mxu0 0.0
    %138 = vmatprep.subr.mxu0 0.0
    %139 = vmatpush2.msra.mxu0 0.0
    %140 = vmatprep.subr.mxu0 0.0
    %141 = vmatpush2.msra.mxu0 0.0
    %142 = vmatprep.subr.mxu0 0.0
    %143 = vmatpush2.msra.mxu0 0.0
    %144 = vmatprep.subr.mxu0 0.0
    %145 = vmatpush2.msra.mxu0 0.0
    %146 = vmatprep.subr.mxu0 0.0
    %147 = vmatpush2.msra.mxu0 0.0
    %148 = vmatprep.subr.mxu0 0.0
    %149 = vmatpush2.msra.mxu0 0.0
    %150 = vmatprep.mubr.f32.mxu0 0.0
    %151 = vmatmul.mubr.f32.gmra.mxu0 %v84
    %v152 = vpop.f32.mrf.mxu0
    %v153 = vadd.f32 %v81, %v152
    %v154 = vpop.f32.mrf.mxu0
    %155 = vdwg.mxu0
    %v156 = vtanh.pop %v153
    %v157 = vlaneseq
    %v158 = vshrl.u32 %v157, 7
    %v159 = vsub.s32 0, %v158
    %v160 = vrot.slane %v76, %v159
    %161 = vmatprep.subr.mxu0 0.0
    %162 = vmatpush1.msra.mxu0 %v58
    %163 = vmatprep.subr.mxu0 0.0
    %164 = vmatpush1.msra.mxu0 %v57
    %165 = vmatprep.subr.mxu0 0.0
    %166 = vmatpush1.msra.mxu0 %v56
    %167 = vmatprep.subr.mxu0 0.0
    %168 = vmatpush1.msra.mxu0 %v55
    %169 = vmatprep.subr.mxu0 0.0
    %170 = vmatpush1.msra.mxu0 %v54
    %171 = vmatprep.subr.mxu0 0.0
    %172 = vmatpush1.msra.mxu0 %v53
    %173 = vmatprep.subr.mxu0 0.0
    %174 = vmatpush1.msra.mxu0 %v52
    %175 = vmatprep.subr.mxu0 0.0
    %176 = vmatpush1.msra.mxu0 %v51
    %177 = vmatprep.subr.mxu0 0.0
    %178 = vmatpush1.msra.mxu0 %v50
    %179 = vmatprep.subr.mxu0 0.0
    %180 = vmatpush1.msra.mxu0 %v49
    %181 = vmatprep.subr.mxu0 0.0
    %182 = vmatpush1.msra.mxu0 %v48
    %183 = vmatprep.subr.mxu0 0.0
    %184 = vmatpush1.msra.mxu0 %v47
    %185 = vmatprep.subr.mxu0 0.0
    %186 = vmatpush1.msra.mxu0 %v46
    %187 = vmatprep.subr.mxu0 0.0
    %188 = vmatpush1.msra.mxu0 %v45
    %189 = vmatprep.subr.mxu0 0.0
    %190 = vmatpush1.msra.mxu0 %v44
    %191 = vmatprep.subr.mxu0 0.0
    %192 = vmatpush1.msra.mxu0 %v43
    %193 = vmatprep.subr.mxu0 0.0
    %194 = vmatpush2.msra.mxu0 0.0
    %195 = vmatprep.subr.mxu0 0.0
    %196 = vmatpush2.msra.mxu0 0.0
    %197 = vmatprep.subr.mxu0 0.0
    %198 = vmatpush2.msra.mxu0 0.0
    %199 = vmatprep.subr.mxu0 0.0
    %200 = vmatpush2.msra.mxu0 0.0
    %201 = vmatprep.subr.mxu0 0.0
    %202 = vmatpush2.msra.mxu0 0.0
    %203 = vmatprep.subr.mxu0 0.0
    %204 = vmatpush2.msra.mxu0 0.0
    %205 = vmatprep.subr.mxu0 0.0
    %206 = vmatpush2.msra.mxu0 0.0
    %207 = vmatprep.subr.mxu0 0.0
    %208 = vmatpush2.msra.mxu0 0.0
    %209 = vmatprep.subr.mxu0 0.0
    %210 = vmatpush2.msra.mxu0 0.0
    %211 = vmatprep.subr.mxu0 0.0
    %212 = vmatpush2.msra.mxu0 0.0
    %213 = vmatprep.subr.mxu0 0.0
    %214 = vmatpush2.msra.mxu0 0.0
    %215 = vmatprep.subr.mxu0 0.0
    %216 = vmatpush2.msra.mxu0 0.0
    %217 = vmatprep.subr.mxu0 0.0
    %218 = vmatpush2.msra.mxu0 0.0
    %219 = vmatprep.subr.mxu0 0.0
    %220 = vmatpush2.msra.mxu0 0.0
    %221 = vmatprep.subr.mxu0 0.0
    %222 = vmatpush2.msra.mxu0 0.0
    %223 = vmatprep.subr.mxu0 0.0
    %224 = vmatpush2.msra.mxu0 0.0
    %225 = vmatprep.mubr.f32.mxu0 0.0
    %226 = vmatmul.mubr.f32.gmra.mxu0 %v156
    %v227 = vpop.f32.mrf.mxu0
    %v228 = vadd.f32 %v160, %v227
    %v229 = vpop.f32.mrf.mxu0
    %230 = vdwg.mxu0
    %v231 = vtanh.pop %v228
    %v232 = vlaneseq
    %v233 = vshrl.u32 %v232, 7
    %v234 = vsub.s32 0, %v233
    %v235 = vrot.slane %v77, %v234
    %236 = vmatprep.subr.mxu0 0.0
    %237 = vmatpush1.msra.mxu0 %v74
    %238 = vmatprep.subr.mxu0 0.0
    %239 = vmatpush1.msra.mxu0 %v73
    %240 = vmatprep.subr.mxu0 0.0
    %241 = vmatpush1.msra.mxu0 %v72
    %242 = vmatprep.subr.mxu0 0.0
    %243 = vmatpush1.msra.mxu0 %v71
    %244 = vmatprep.subr.mxu0 0.0
    %245 = vmatpush1.msra.mxu0 %v70
    %246 = vmatprep.subr.mxu0 0.0
    %247 = vmatpush1.msra.mxu0 %v69
    %248 = vmatprep.subr.mxu0 0.0
    %249 = vmatpush1.msra.mxu0 %v68
    %250 = vmatprep.subr.mxu0 0.0
    %251 = vmatpush1.msra.mxu0 %v67
    %252 = vmatprep.subr.mxu0 0.0
    %253 = vmatpush1.msra.mxu0 %v66
    %254 = vmatprep.subr.mxu0 0.0
    %255 = vmatpush1.msra.mxu0 %v65
    %256 = vmatprep.subr.mxu0 0.0
    %257 = vmatpush1.msra.mxu0 %v64
    %258 = vmatprep.subr.mxu0 0.0
    %259 = vmatpush1.msra.mxu0 %v63
    %260 = vmatprep.subr.mxu0 0.0
    %261 = vmatpush1.msra.mxu0 %v62
    %262 = vmatprep.subr.mxu0 0.0
    %263 = vmatpush1.msra.mxu0 %v61
    %264 = vmatprep.subr.mxu0 0.0
    %265 = vmatpush1.msra.mxu0 %v60
    %266 = vmatprep.subr.mxu0 0.0
    %267 = vmatpush1.msra.mxu0 %v59
    %268 = vmatprep.subr.mxu0 0.0
    %269 = vmatpush2.msra.mxu0 0.0
    %270 = vmatprep.subr.mxu0 0.0
    %271 = vmatpush2.msra.mxu0 0.0
    %272 = vmatprep.subr.mxu0 0.0
    %273 = vmatpush2.msra.mxu0 0.0
    %274 = vmatprep.subr.mxu0 0.0
    %275 = vmatpush2.msra.mxu0 0.0
    %276 = vmatprep.subr.mxu0 0.0
    %277 = vmatpush2.msra.mxu0 0.0
    %278 = vmatprep.subr.mxu0 0.0
    %279 = vmatpush2.msra.mxu0 0.0
    %280 = vmatprep.subr.mxu0 0.0
    %281 = vmatpush2.msra.mxu0 0.0
    %282 = vmatprep.subr.mxu0 0.0
    %283 = vmatpush2.msra.mxu0 0.0
    %284 = vmatprep.subr.mxu0 0.0
    %285 = vmatpush2.msra.mxu0 0.0
    %286 = vmatprep.subr.mxu0 0.0
    %287 = vmatpush2.msra.mxu0 0.0
    %288 = vmatprep.subr.mxu0 0.0
    %289 = vmatpush2.msra.mxu0 0.0
    %290 = vmatprep.subr.mxu0 0.0
    %291 = vmatpush2.msra.mxu0 0.0
    %292 = vmatprep.subr.mxu0 0.0
    %293 = vmatpush2.msra.mxu0 0.0
    %294 = vmatprep.subr.mxu0 0.0
    %295 = vmatpush2.msra.mxu0 0.0
    %296 = vmatprep.subr.mxu0 0.0
    %297 = vmatpush2.msra.mxu0 0.0
    %298 = vmatprep.subr.mxu0 0.0
    %299 = vmatpush2.msra.mxu0 0.0
    %300 = vmatprep.mubr.f32.mxu0 0.0
    %301 = vmatmul.mubr.f32.gmra.mxu0 %v231
    %v302 = vpop.f32.mrf.mxu0
    %v303 = vadd.f32 %v235, %v302
    %v304 = vpop.f32.mrf.mxu0
    %305 = vdwg.mxu0
    %v306 = vlaneseq
    %v307 = vand.u32 %v306, 127
    %vm308 = vcmp.lt.s32.totalorder %v307, 3
    %v309 = vsel %vm308, %v303, -inf
    %310 = vmax.xlane.f32.xlu0 %v309
    %v311 = vpop.xlane.xlu0 %310
    %v312 = vsub.f32 %v309, %v311
    %v313 = vmul.f32 %v312, 1.442695
    %v314 = vpow.pop %v313
    %315 = vadd.xlane.f32.xlu0 %v314
    %v316 = vpop.xlane.xlu0 %315
    %v317 = vrcp.pop %v316
    %v318 = vmul.f32 %v314, %v317
    %v319 = vsel %vm308, %v318, %v303
    %320 = vst [vmem:[#allocation7] sm:$0xff] %v319
    // Predicated region
    $region18: #{tpu_custom_call.1} parent=1 // pred_check
      _
    $region19: #{tpu_custom_call.1} parent=1 // pred_check_branch
      %322 = sbr.rel (0) target = $region21
    $region20: #{tpu_custom_call.1} parent=1 // pred_region
      %s324 = ssub.s32 128, 128
      %325 = vsyncadd [#allocation4], %s324
      %s327 = sshll.u32 [#allocation7], 4
      %s328 = int_to_ptr.vmem [resolvable:$true] %s327
      %330 = dma.vmem_to_hbm [thread:$0]  %s328, 128, %s2, [#allocation4]
    $region21: #{tpu_custom_call.1} parent=1 // pred_fallthru
      _
    // Predicated region
    $region22: #{tpu_custom_call.1} parent=1 // pred_check
      _
    $region23: #{tpu_custom_call.1} parent=1 // pred_check_branch
      %332 = sbr.rel (0) target = $region25
    $region24: #{tpu_custom_call.1} parent=1 // pred_region
      %333 = dma.done [#allocation4], 128
    $region25: #{tpu_custom_call.1} parent=1 // pred_fallthru
      _
    %334 = vsyncpa [#allocation3], 1
    %335 = vsyncpa [#allocation6], 1
    %336 = vsyncpa [#allocation4], 1

</llo_original>
